<compile_context>
chip_gen: v7x
topology: tpu7x:2x2x1
jax: 0.10.0
libtpu: 0.0.40
codegen_flags: <defaults>
</compile_context>

<pallas_src>
import math

import jax
import jax.numpy as jnp
from jax.experimental import pallas as pl
from jax.experimental.pallas import tpu as pltpu


def _round_up(x, m):
    return ((x + m - 1) // m) * m


# --------------------------------------------------------------------------
# Kernel 1: support = X @ W   (computed ONCE, row-tiled over nodes)
# --------------------------------------------------------------------------
def _support_kernel(x_ref, w_ref, out_ref):
    out_ref[...] = jnp.dot(
        x_ref[...], w_ref[...], preferred_element_type=jnp.float32
    ).astype(out_ref.dtype)


# --------------------------------------------------------------------------
# Kernel 2: out = adj @ support + bias   (K-tiled contraction, f32 accumulator)
# --------------------------------------------------------------------------
def _aggregate_kernel(adj_ref, s_ref, b_ref, out_ref, acc_ref):
    k = pl.program_id(1)

    @pl.when(k == 0)
    def _():
        acc_ref[...] = jnp.zeros_like(acc_ref)

    acc_ref[...] += jnp.dot(
        adj_ref[...], s_ref[...], preferred_element_type=jnp.float32
    )

    # Bias add + cast only in the finalize step (not per k-step).
    @pl.when(k == pl.num_programs(1) - 1)
    def _():
        out_ref[...] = (acc_ref[...] + b_ref[...]).astype(out_ref.dtype)


def graph_convolution(x, adj, weight, bias=None, *,
                      tile_m=128, tile_k=256,
                      compute_dtype=jnp.bfloat16):
    """GCN layer forward.

    x: [N, F_in], adj: [N, N] (dense), weight: [F_in, F_out], bias: [F_out]|None.
    tile_m: output-node rows per step (>=128 fills the MXU sublane dim).
    tile_k: contraction (neighbor) tile; sweep larger (512-1024) on v5e/v6e,
            keep modest on v7x (64 MiB VMEM).  Defaults fit every generation.
    compute_dtype: matmul operand dtype (bf16 halves adj HBM traffic; f32
            accumulation is always used on the MXU).
    """
    n, f_in = x.shape
    f_in_w, f_out = weight.shape
    assert f_in_w == f_in, "weight/in_features mismatch"
    assert adj.shape == (n, n), "adj must be [N, N]"
    out_dtype = x.dtype

    # Lane-dense feature dim (unmasked stores) and node dim divisible by tiles.
    f_out_p = _round_up(f_out, 128)
    lcm_mk = (tile_m * tile_k) // math.gcd(tile_m, tile_k)
    n_p = _round_up(n, lcm_mk)

    # Zero-padding is exact for this op: padded adj rows/cols and x rows are 0.
    x_c = jnp.pad(x, ((0, n_p - n), (0, 0))).astype(compute_dtype)
    w_c = jnp.pad(weight, ((0, 0), (0, f_out_p - f_out))).astype(compute_dtype)
    adj_c = jnp.pad(adj, ((0, n_p - n), (0, n_p - n))).astype(compute_dtype)
    if bias is None:
        b2d = jnp.zeros((1, f_out_p), dtype=jnp.float32)
    else:
        b2d = jnp.pad(bias.astype(jnp.float32),
                      (0, f_out_p - f_out)).reshape(1, f_out_p)

    # ---- 1) support = X @ W, hoisted out of the adj loop --------------------
    support = pl.pallas_call(
        _support_kernel,
        out_shape=jax.ShapeDtypeStruct((n_p, f_out_p), compute_dtype),
        grid_spec=pltpu.PrefetchScalarGridSpec(
            num_scalar_prefetch=0,
            grid=(n_p // tile_m,),
            in_specs=[
                pl.BlockSpec((tile_m, f_in), lambda i: (i, 0)),      # X row-tile
                pl.BlockSpec((f_in, f_out_p), lambda i: (0, 0)),     # full W
            ],
            out_specs=pl.BlockSpec((tile_m, f_out_p), lambda i: (i, 0)),
        ),
        compiler_params=pltpu.CompilerParams(
            dimension_semantics=("parallel",),
        ),
    )(x_c, w_c)

    # ---- 2) out = adj @ support + bias, K-tiled ------------------------------
    out_p = pl.pallas_call(
        _aggregate_kernel,
        out_shape=jax.ShapeDtypeStruct((n_p, f_out_p), out_dtype),
        grid_spec=pltpu.PrefetchScalarGridSpec(
            num_scalar_prefetch=0,
            grid=(n_p // tile_m, n_p // tile_k),
            in_specs=[
                pl.BlockSpec((tile_m, tile_k), lambda i, k: (i, k)),   # adj tile
                pl.BlockSpec((tile_k, f_out_p), lambda i, k: (k, 0)),  # support K-tile
                pl.BlockSpec((1, f_out_p), lambda i, k: (0, 0)),       # bias (resident)
            ],
            out_specs=pl.BlockSpec((tile_m, f_out_p), lambda i, k: (i, 0)),
            scratch_shapes=[pltpu.VMEM((tile_m, f_out_p), jnp.float32)],
        ),
        compiler_params=pltpu.CompilerParams(
            dimension_semantics=("parallel", "arbitrary"),
        ),
    )(adj_c, support, b2d)

    return out_p[:n, :f_out]


if __name__ == "__main__":
    # Small, deterministic setup; N deliberately NOT a multiple of the tile
    # sizes and F_OUT not a multiple of 128, to exercise the padding paths.
    N = 200          # number of nodes
    F_IN = 32        # in_features
    F_OUT = 64       # out_features

    key = jax.random.PRNGKey(0)
    k_x, k_adj, k_w, k_b = jax.random.split(key, 4)

    x = jax.random.normal(k_x, (N, F_IN), dtype=jnp.float32)
    adj = jax.random.uniform(k_adj, (N, N), dtype=jnp.float32)
    adj = adj / jnp.sum(adj, axis=1, keepdims=True)   # row-normalized dense "adj"

    # reset_parameters(): uniform(-stdv, stdv), stdv = 1/sqrt(in_features)
    stdv = 1.0 / math.sqrt(F_IN)
    weight = jax.random.uniform(k_w, (F_IN, F_OUT), dtype=jnp.float32,
                                minval=-stdv, maxval=stdv)
    bias = jax.random.uniform(k_b, (F_OUT,), dtype=jnp.float32,
                              minval=-stdv, maxval=stdv)

    out = graph_convolution(x, adj, weight, bias)
    out = jax.block_until_ready(out)
    assert out.shape == (N, F_OUT)

    # Reference with identical bf16-operand / f32-accumulate rounding.
    xb = x.astype(jnp.bfloat16)
    wb = weight.astype(jnp.bfloat16)
    ab = adj.astype(jnp.bfloat16)
    support_ref = jnp.dot(xb, wb, preferred_element_type=jnp.float32
                          ).astype(jnp.bfloat16)
    ref_cast = jnp.dot(ab, support_ref, preferred_element_type=jnp.float32) + bias
    assert jnp.allclose(out, ref_cast, atol=1e-3, rtol=1e-3), \
        "mismatch vs bf16-cast reference"

    # Loose sanity check against the full-f32 PyTorch-equivalent math.
    ref_f32 = adj @ (x @ weight) + bias
    assert jnp.allclose(out, ref_f32, atol=5e-2, rtol=5e-2), \
        "mismatch vs f32 reference"

    print("KERNEL_OK")
</pallas_src>

<mosaic_0001>
module attributes {stable_mosaic.version = 11 : i64} {
  func.func @_support_kernel(%arg0: i32, %arg1: memref<128x32xbf16, #tpu.memory_space<vmem>>, %arg2: memref<32x128xbf16, #tpu.memory_space<vmem>>, %arg3: memref<128x128xbf16, #tpu.memory_space<vmem>>) attributes {dimension_semantics = [#tpu.dimension_semantics<parallel>], iteration_bounds = array<i64: 2>, scalar_prefetch = 0 : i64, scratch_operands = 0 : i64, tpu.core_type = #tpu.core_type<tc>, window_params = [{transform_indices = @transform_0, window_bounds = array<i64: 128, 32>}, {pipeline_mode = #tpu.pipeline_mode<synchronous>, transform_indices = @transform_1, window_bounds = array<i64: 32, 128>}, {transform_indices = @transform_2, window_bounds = array<i64: 128, 128>}]} {
    %c0 = arith.constant 0 : index
    %c0_0 = arith.constant 0 : index
    %0 = vector.load %arg1[%c0, %c0_0] : memref<128x32xbf16, #tpu.memory_space<vmem>>, vector<128x32xbf16>
    %c0_1 = arith.constant 0 : index
    %c0_2 = arith.constant 0 : index
    %1 = vector.load %arg2[%c0_1, %c0_2] : memref<32x128xbf16, #tpu.memory_space<vmem>>, vector<32x128xbf16>
    %cst = arith.constant dense<0.000000e+00> : vector<128x128xf32>
    %2 = tpu.matmul %0, %1, %cst {dimension_numbers = #tpu.dot_dimension_numbers<[1], [0], [0], [1], [0, 0, 1, 1], [], []>} : vector<128x32xbf16>, vector<32x128xbf16>, vector<128x128xf32> -> vector<128x128xf32>
    %3 = arith.truncf %2 : vector<128x128xf32> to vector<128x128xbf16>
    %c0_3 = arith.constant 0 : index
    %c0_4 = arith.constant 0 : index
    %4 = vector.load %arg3[%c0_3, %c0_4] : memref<128x128xbf16, #tpu.memory_space<vmem>>, vector<128x128xbf16>
    tpu.vector_store %arg3[%c0_3, %c0_4], %3 {strides = array<i32>} : memref<128x128xbf16, #tpu.memory_space<vmem>>, vector<128x128xbf16>,
    return
  }
  func.func @transform_0(%arg0: i32) -> (i32, i32) {
    %c0_i32 = arith.constant 0 : i32
    %c0_i32_0 = arith.constant 0 : i32
    return %arg0, %c0_i32 : i32, i32
  }
  func.func @transform_1(%arg0: i32) -> (i32, i32) {
    %c0_i32 = arith.constant 0 : i32
    %c0_i32_0 = arith.constant 0 : i32
    %c0_i32_1 = arith.constant 0 : i32
    return %c0_i32, %c0_i32_0 : i32, i32
  }
  func.func @transform_2(%arg0: i32) -> (i32, i32) {
    %c0_i32 = arith.constant 0 : i32
    %c0_i32_0 = arith.constant 0 : i32
    return %arg0, %c0_i32 : i32, i32
  }
}

</mosaic_0001>

<llo_original>
// kernel: tpu_custom_call.1
$region0: #{tpu_custom_call.1}
  #allocation0 [shape = 'u32[]', space=smem, size = 0x4, offset = 0x4, fixed_abs, tag = 'smem constant byte address 0x4 - core index']
  #allocation1 [shape = 'u32[144,128]{1,0:T(1,128)}', space=vmem, size = 0x12000, scoped, tag = 'internal scratch']
  %s0 = inlined_call_operand.vmem [shape: bf16[256,32], index: 0, kind: input, shape index: {}]
  %s1 = inlined_call_operand.vmem [shape: bf16[32,128], index: 1, kind: input, shape index: {}]
  %s2 = inlined_call_operand.hbm [shape: bf16[256,128], index: 2, kind: output, shape index: {}]
  %s3 = sld [smem:[#allocation0]]
  $region41: #{tpu_custom_call.1} parent=0
    _
  %s5 = ssub.s32 1, %s3
  %s6 = scalar_select 0, %s5, %s3
  $region1: #{tpu_custom_call.1} parent=0
    #allocation2 [shape = 'u8[65536]{0}', space=vmem, size = 0x10000, scoped, tag = 'output window, operand 0']
    #allocation3 [shape = 's32[2]{0}', space=sflag, size = 0x8, scoped, tag = 'scoped memory for tpu_custom_call.1']
    %7 = vsyncpa [#allocation3], 0
    %s8 = scalar_lea.sflag [#allocation3], 1
    %9 = vsyncpa %s8, 0
    loop: start=0, step=1, limit=4
    $region2: #{tpu_custom_call.1} parent=1 // loop_pre_header
      _
    $region3: #{tpu_custom_call.1} parent=1 // loop_header
      %s11 = sphi 0, %s15
      %p12 = scmp.ge.s32.totalorder %s11, 4
      %s21 = sphi 0, %s23
      %s24 = sphi 0, %s21
      %s25 = sphi 0, %s24
      %s41 = sphi 0, %s25
      %s45 = sphi 0, %s45
      %s47 = sphi 0, %s45
      %s48 = sphi 0, %s47
      %s62 = sphi 0, %s48
      %s68 = sphi 0, %s70
      %s71 = sphi 0, %s68
      %s72 = sphi 0, %s71
      %s88 = sphi 0, %s72
    $region4: #{tpu_custom_call.1} parent=1 // loop_header_branch
      %14 = sbr.rel (%p12) target = $region8
    $region5: #{tpu_custom_call.1} parent=1 // loop_body
      %s16 = ssub.s32 %s11, 1
      %s17 = ssub.s32 %s11, 2
      %s18 = sadd.s32 %s11, 1
      %s19 = ssub.s32 %s11, %s18
      %p20 = scmp.eq.s32.totalorder %s19, 0
      %s22 = sadd.s32 %s21, 1
      %s23 = scalar_select %p20, %s21, %s22
      %p26 = pneg %p20
      %p27 = scmp.eq.s32.totalorder %s11, 1
      %p28 = por %p26, %p27
      %p29 = scmp.ne.s32.totalorder %s21, %s24
      %p30 = scmp.eq.s32.totalorder %s11, 0
      %p31 = por %p29, %p30
      %p32 = scmp.ne.s32.totalorder %s21, %s24
      %p33 = scmp.eq.s32.totalorder %s16, 1
      %p34 = por %p32, %p33
      %p35 = scmp.ne.s32.totalorder %s24, %s25
      %p36 = scmp.eq.s32.totalorder %s16, 0
      %p37 = por %p35, %p36
      %p38 = scmp.ne.s32.totalorder %s24, %s25
      %p39 = scmp.eq.s32.totalorder %s17, 1
      %p40 = por %p38, %p39
      %p42 = scmp.ne.s32.totalorder %s25, %s41
      %p43 = scmp.eq.s32.totalorder %s17, 0
      %p44 = por %p42, %p43
      %s46 = sadd.s32 %s45, 1
      %p49 = scmp.eq.s32.totalorder %s11, 1
      %p50 = scmp.ne.s32.totalorder %s45, %s47
      %p51 = scmp.eq.s32.totalorder %s11, 0
      %p52 = por %p50, %p51
      %p53 = scmp.ne.s32.totalorder %s45, %s47
      %p54 = scmp.eq.s32.totalorder %s16, 1
      %p55 = por %p53, %p54
      %p56 = scmp.ne.s32.totalorder %s47, %s48
      %p57 = scmp.eq.s32.totalorder %s16, 0
      %p58 = por %p56, %p57
      %p59 = scmp.ne.s32.totalorder %s47, %s48
      %p60 = scmp.eq.s32.totalorder %s17, 1
      %p61 = por %p59, %p60
      %p63 = scmp.ne.s32.totalorder %s48, %s62
      %p64 = scmp.eq.s32.totalorder %s17, 0
      %p65 = por %p63, %p64
      %s66 = ssub.s32 %s11, %s18
      %p67 = scmp.eq.s32.totalorder %s66, 0
      %s69 = sadd.s32 %s68, 1
      %s70 = scalar_select %p67, %s68, %s69
      %p73 = pneg %p67
      %p74 = scmp.eq.s32.totalorder %s11, 1
      %p75 = por %p73, %p74
      %p76 = scmp.ne.s32.totalorder %s68, %s71
      %p77 = scmp.eq.s32.totalorder %s11, 0
      %p78 = por %p76, %p77
      %p79 = scmp.ne.s32.totalorder %s68, %s71
      %p80 = scmp.eq.s32.totalorder %s16, 1
      %p81 = por %p79, %p80
      %p82 = scmp.ne.s32.totalorder %s71, %s72
      %p83 = scmp.eq.s32.totalorder %s16, 0
      %p84 = por %p82, %p83
      %p85 = scmp.ne.s32.totalorder %s71, %s72
      %p86 = scmp.eq.s32.totalorder %s17, 1
      %p87 = por %p85, %p86
      %p89 = scmp.ne.s32.totalorder %s72, %s88
      %p90 = scmp.eq.s32.totalorder %s17, 0
      %p91 = por %p89, %p90
      %p92 = scmp.le.s32.totalorder 1, %s11
      %p93 = scmp.lt.s32.totalorder %s11, 3
      %p94 = pnand %p92, %p93
      %p95 = pneg %p94
      // Predicated region
      $region9: #{tpu_custom_call.1} parent=5 // pred_check
        _
      $region10: #{tpu_custom_call.1} parent=5 // pred_check_branch
        %97 = sbr.rel (%p94) target = $region12
      $region11: #{tpu_custom_call.1} parent=5 // pred_region
        %s98 = ssub.s32 %s11, 1
        // Predicated region
        $region13: #{tpu_custom_call.1} parent=11 // pred_check
          %p99 = pneg %p58
        $region14: #{tpu_custom_call.1} parent=11 // pred_check_branch
          %101 = sbr.rel (%p99) target = $region16
        $region15: #{tpu_custom_call.1} parent=11 // pred_region
          _
        $region16: #{tpu_custom_call.1} parent=11 // pred_fallthru
          _
      $region12: #{tpu_custom_call.1} parent=5 // pred_fallthru
        _
      %p102 = scmp.lt.s32.totalorder %s11, 2
      // Predicated region
      $region17: #{tpu_custom_call.1} parent=5 // pred_check
        %p103 = pneg %p102
      $region18: #{tpu_custom_call.1} parent=5 // pred_check_branch
        %105 = sbr.rel (%p103) target = $region20
      $region19: #{tpu_custom_call.1} parent=5 // pred_region
        // Predicated region
        $region21: #{tpu_custom_call.1} parent=19 // pred_check
          %p106 = pneg %p31
        $region22: #{tpu_custom_call.1} parent=19 // pred_check_branch
          %108 = sbr.rel (%p106) target = $region24
        $region23: #{tpu_custom_call.1} parent=19 // pred_region
          %s109 = smul.u32 16, %s11
          %p110 = scmp.lt.s32.totalorder %s109, 31
          %s111 = scalar_select %p110, %s109, 31
          %s112 = smul.addr %s111, 4
          %s113 = scalar_lea.vmem %s0, %s112
          %s114 = smul.u32 16, %s11
        $region24: #{tpu_custom_call.1} parent=19 // pred_fallthru
          _
      $region20: #{tpu_custom_call.1} parent=5 // pred_fallthru
        _
      %p115 = scmp.le.s32.totalorder 1, %s11
      %p116 = scmp.lt.s32.totalorder %s11, 3
      %p117 = pnand %p115, %p116
      %p118 = pneg %p117
      // Predicated region
      $region25: #{tpu_custom_call.1} parent=5 // pred_check
        _
      $region26: #{tpu_custom_call.1} parent=5 // pred_check_branch
        %120 = sbr.rel (%p117) target = $region28
      $region27: #{tpu_custom_call.1} parent=5 // pred_region
        %s121 = ssub.s32 %s11, 1
        %s122 = smul.u32 16, %s16
        %p123 = scmp.lt.s32.totalorder %s122, 31
        %s124 = scalar_select %p123, %s122, 31
        %s125 = smul.addr %s124, 4
        %s126 = scalar_lea.vmem %s0, %s125
        %p127 = pneg %p37
        %p128 = pneg %p34
        %p129 = pneg %p58
        %p130 = pneg %p55
        %p131 = pneg %p84
        %p132 = pneg %p81
        %s133 = sand.u32 %s71, 1
        %s134 = scalar_lea.sflag [#allocation3], %s133
        %s135 = sand.u32 %s71, 1
        %s136 = smul.addr %s135, 64
        %s137 = scalar_lea.vmem [#allocation2], %s136
        %s138 = smul.u32 16, %s16
        %p139 = scmp.lt.s32.totalorder %s138, 31
        %s140 = scalar_select %p139, %s138, 31
        %s141 = smul.addr %s140, 4
        %s142 = scalar_lea.vmem %s0, %s141
        %s143 = smul.u32 16, %s16
        %s144 = smul.u32 16, %s16
        %v146 = vld [vmem:[%s142] sm:$0xf]
        %v147 = vld [vmem:[%s142 + $0x4] sm:$0xf]
        %v148 = vld [vmem:[%s142 + $0x8] sm:$0xf]
        %v149 = vld [vmem:[%s142 + $0xc] sm:$0xf]
        %v150 = vld [vmem:[%s142 + $0x10] sm:$0xf]
        %v151 = vld [vmem:[%s142 + $0x14] sm:$0xf]
        %v152 = vld [vmem:[%s142 + $0x18] sm:$0xf]
        %v153 = vld [vmem:[%s142 + $0x1c] sm:$0xf]
        %v154 = vld [vmem:[%s142 + $0x20] sm:$0xf]
        %v155 = vld [vmem:[%s142 + $0x24] sm:$0xf]
        %v156 = vld [vmem:[%s142 + $0x28] sm:$0xf]
        %v157 = vld [vmem:[%s142 + $0x2c] sm:$0xf]
        %v158 = vld [vmem:[%s142 + $0x30] sm:$0xf]
        %v159 = vld [vmem:[%s142 + $0x34] sm:$0xf]
        %v160 = vld [vmem:[%s142 + $0x38] sm:$0xf]
        %v161 = vld [vmem:[%s142 + $0x3c] sm:$0xf]
        %v162 = vld [vmem:[%s1] sm:$0xf]
        %v163 = vld [vmem:[%s1 + $0x4] sm:$0xf]
        %v164 = vld [vmem:[%s1 + $0x8] sm:$0xf]
        %v165 = vld [vmem:[%s1 + $0xc] sm:$0xf]
        %v182 = vunpack.c.l.b16 %v146
        %v183 = vunpack.c.l.b16 %v147
        %v184 = vunpack.c.l.b16 %v148
        %v185 = vunpack.c.l.b16 %v149
        %v186 = vunpack.c.l.b16 %v150
        %v187 = vunpack.c.l.b16 %v151
        %v188 = vunpack.c.l.b16 %v152
        %v189 = vunpack.c.l.b16 %v153
        %v190 = vunpack.c.l.b16 %v154
        %v191 = vunpack.c.l.b16 %v155
        %v192 = vunpack.c.l.b16 %v156
        %v193 = vunpack.c.l.b16 %v157
        %v194 = vunpack.c.l.b16 %v158
        %v195 = vunpack.c.l.b16 %v159
        %v196 = vunpack.c.l.b16 %v160
        %v197 = vunpack.c.l.b16 %v161
        %v198 = vpack.c.b16 %v183, %v182
        %v199 = vpack.c.b16 %v185, %v184
        %v200 = vpack.c.b16 %v187, %v186
        %v201 = vpack.c.b16 %v189, %v188
        %v202 = vpack.c.b16 %v191, %v190
        %v203 = vpack.c.b16 %v193, %v192
        %v204 = vpack.c.b16 %v195, %v194
        %v205 = vpack.c.b16 %v197, %v196
        %v210 = vunpack.c.l.b16 %v162
        %v211 = vunpack.c.l.b16 %v163
        %v212 = vunpack.c.l.b16 %v164
        %v213 = vunpack.c.l.b16 %v165
        %v214 = vpack.c.b16 %v211, %v210
        %v215 = vpack.c.b16 %v213, %v212
        %vm218 = vcmask 261120
        %v220 = vsel %vm218, %v198, 0
        %v223 = vsel %vm218, %v199, 0
        %v226 = vsel %vm218, %v200, 0
        %v229 = vsel %vm218, %v201, 0
        %v232 = vsel %vm218, %v202, 0
        %v235 = vsel %vm218, %v203, 0
        %v238 = vsel %vm218, %v204, 0
        %v241 = vsel %vm218, %v205, 0
        %243 = vmatprep.subr.bf16.mxu0 0
        %244 = vmatpush1.bf16.msra.mxu0 %v214
        %245 = vmatprep.subr.bf16.mxu0 0
        %246 = vmatpush1.bf16.msra.mxu0 %v215
        %247 = vmatprep.subr.bf16.mxu0 0
        %248 = vmatpush1.bf16.msra.mxu0 0
        %249 = vmatprep.subr.bf16.mxu0 0
        %250 = vmatpush1.bf16.msra.mxu0 0
        %251 = vmatprep.subr.bf16.mxu0 0
        %252 = vmatpush1.bf16.msra.mxu0 0
        %253 = vmatprep.subr.bf16.mxu0 0
        %254 = vmatpush1.bf16.msra.mxu0 0
        %255 = vmatprep.subr.bf16.mxu0 0
        %256 = vmatpush1.bf16.msra.mxu0 0
        %257 = vmatprep.subr.bf16.mxu0 0
        %258 = vmatpush1.bf16.msra.mxu0 0
        %259 = vmatprep.subr.bf16.mxu0 0
        %260 = vmatpush1.bf16.msra.mxu0 0
        %261 = vmatprep.subr.bf16.mxu0 0
        %262 = vmatpush1.bf16.msra.mxu0 0
        %263 = vmatprep.subr.bf16.mxu0 0
        %264 = vmatpush1.bf16.msra.mxu0 0
        %265 = vmatprep.subr.bf16.mxu0 0
        %266 = vmatpush1.bf16.msra.mxu0 0
        %267 = vmatprep.subr.bf16.mxu0 0
        %268 = vmatpush1.bf16.msra.mxu0 0
        %269 = vmatprep.subr.bf16.mxu0 0
        %270 = vmatpush1.bf16.msra.mxu0 0
        %271 = vmatprep.subr.bf16.mxu0 0
        %272 = vmatpush1.bf16.msra.mxu0 0
        %273 = vmatprep.subr.bf16.mxu0 0
        %274 = vmatpush1.bf16.msra.mxu0 0
        %275 = vmatprep.mubr.bf16.mxu0 0
        %276 = vmatmul.mubr.bf16.gmra.mrb[0].mxu0 %v220
        %v277 = vpop.f32.mrb[0].mxu0
        %v278 = vadd.f32 0.0, %v277
        %v279 = vpop.f32.mrb[0].mxu0
        %v280 = vpop.f32.mrb[0].mxu0
        %v281 = vadd.f32 0.0, %v280
        %v282 = vpop.f32.mrb[0].mxu0
        %283 = vmatprep.mubr.bf16.mxu0 0
        %284 = vmatmul.mubr.bf16.gmra.mrb[0].mxu0 %v223
        %v285 = vpop.f32.mrb[0].mxu0
        %v286 = vadd.f32 0.0, %v285
        %v287 = vpop.f32.mrb[0].mxu0
        %v288 = vpop.f32.mrb[0].mxu0
        %v289 = vadd.f32 0.0, %v288
        %v290 = vpop.f32.mrb[0].mxu0
        %291 = vmatprep.mubr.bf16.mxu0 0
        %292 = vmatmul.mubr.bf16.gmra.mrb[0].mxu0 %v226
        %v293 = vpop.f32.mrb[0].mxu0
        %v294 = vadd.f32 0.0, %v293
        %v295 = vpop.f32.mrb[0].mxu0
        %v296 = vpop.f32.mrb[0].mxu0
        %v297 = vadd.f32 0.0, %v296
        %v298 = vpop.f32.mrb[0].mxu0
        %299 = vmatprep.mubr.bf16.mxu0 0
        %300 = vmatmul.mubr.bf16.gmra.mrb[0].mxu0 %v229
        %v301 = vpop.f32.mrb[0].mxu0
        %v302 = vadd.f32 0.0, %v301
        %v303 = vpop.f32.mrb[0].mxu0
        %v304 = vpop.f32.mrb[0].mxu0
        %v305 = vadd.f32 0.0, %v304
        %v306 = vpop.f32.mrb[0].mxu0
        %307 = vmatprep.mubr.bf16.mxu0 0
        %308 = vmatmul.mubr.bf16.gmra.mrb[0].mxu0 %v232
        %v309 = vpop.f32.mrb[0].mxu0
        %v310 = vadd.f32 0.0, %v309
        %v311 = vpop.f32.mrb[0].mxu0
        %v312 = vpop.f32.mrb[0].mxu0
        %v313 = vadd.f32 0.0, %v312
        %v314 = vpop.f32.mrb[0].mxu0
        %315 = vmatprep.mubr.bf16.mxu0 0
        %316 = vmatmul.mubr.bf16.gmra.mrb[0].mxu0 %v235
        %v317 = vpop.f32.mrb[0].mxu0
        %v318 = vadd.f32 0.0, %v317
        %v319 = vpop.f32.mrb[0].mxu0
        %v320 = vpop.f32.mrb[0].mxu0
        %v321 = vadd.f32 0.0, %v320
        %v322 = vpop.f32.mrb[0].mxu0
        %323 = vmatprep.mubr.bf16.mxu0 0
        %324 = vmatmul.mubr.bf16.gmra.mrb[0].mxu0 %v238
        %v325 = vpop.f32.mrb[0].mxu0
        %v326 = vadd.f32 0.0, %v325
        %v327 = vpop.f32.mrb[0].mxu0
        %v328 = vpop.f32.mrb[0].mxu0
        %v329 = vadd.f32 0.0, %v328
        %v330 = vpop.f32.mrb[0].mxu0
        %331 = vmatprep.mubr.bf16.mxu0 0
        %332 = vmatmul.mubr.bf16.gmra.mrb[0].mxu0 %v241
        %v333 = vpop.f32.mrb[0].mxu0
        %v334 = vadd.f32 0.0, %v333
        %v335 = vpop.f32.mrb[0].mxu0
        %v336 = vpop.f32.mrb[0].mxu0
        %v337 = vadd.f32 0.0, %v336
        %v338 = vpop.f32.mrb[0].mxu0
        %339 = vdwg.mxu0
        %v340 = vpack.c.bf16 %v281, %v278
        %v341 = vpack.c.bf16 %v289, %v286
        %v342 = vpack.c.bf16 %v297, %v294
        %v343 = vpack.c.bf16 %v305, %v302
        %v344 = vpack.c.bf16 %v313, %v310
        %v345 = vpack.c.bf16 %v321, %v318
        %v346 = vpack.c.bf16 %v329, %v326
        %v347 = vpack.c.bf16 %v337, %v334
        %v356 = vunpack.c.l.b16 %v340
        %v357 = vunpack.c.h.b16 %v340
        %v358 = vunpack.c.l.b16 %v341
        %v359 = vunpack.c.h.b16 %v341
        %v360 = vunpack.c.l.b16 %v342
        %v361 = vunpack.c.h.b16 %v342
        %v362 = vunpack.c.l.b16 %v343
        %v363 = vunpack.c.h.b16 %v343
        %v364 = vunpack.c.l.b16 %v344
        %v365 = vunpack.c.h.b16 %v344
        %v366 = vunpack.c.l.b16 %v345
        %v367 = vunpack.c.h.b16 %v345
        %v368 = vunpack.c.l.b16 %v346
        %v369 = vunpack.c.h.b16 %v346
        %v370 = vunpack.c.l.b16 %v347
        %v371 = vunpack.c.h.b16 %v347
        %v372 = vpack.c.b16 %v356, %v356
        %v373 = vpack.c.b16 %v357, %v357
        %v374 = vpack.c.b16 %v358, %v358
        %v375 = vpack.c.b16 %v359, %v359
        %v376 = vpack.c.b16 %v360, %v360
        %v377 = vpack.c.b16 %v361, %v361
        %v378 = vpack.c.b16 %v362, %v362
        %v379 = vpack.c.b16 %v363, %v363
        %v380 = vpack.c.b16 %v364, %v364
        %v381 = vpack.c.b16 %v365, %v365
        %v382 = vpack.c.b16 %v366, %v366
        %v383 = vpack.c.b16 %v367, %v367
        %v384 = vpack.c.b16 %v368, %v368
        %v385 = vpack.c.b16 %v369, %v369
        %v386 = vpack.c.b16 %v370, %v370
        %v387 = vpack.c.b16 %v371, %v371
        %404 = vst [vmem:[%s137] sm:$0xf] %v372
        %405 = vst [vmem:[%s137 + $0x4] sm:$0xf] %v373
        %406 = vst [vmem:[%s137 + $0x8] sm:$0xf] %v374
        %407 = vst [vmem:[%s137 + $0xc] sm:$0xf] %v375
        %408 = vst [vmem:[%s137 + $0x10] sm:$0xf] %v376
        %409 = vst [vmem:[%s137 + $0x14] sm:$0xf] %v377
        %410 = vst [vmem:[%s137 + $0x18] sm:$0xf] %v378
        %411 = vst [vmem:[%s137 + $0x1c] sm:$0xf] %v379
        %412 = vst [vmem:[%s137 + $0x20] sm:$0xf] %v380
        %413 = vst [vmem:[%s137 + $0x24] sm:$0xf] %v381
        %414 = vst [vmem:[%s137 + $0x28] sm:$0xf] %v382
        %415 = vst [vmem:[%s137 + $0x2c] sm:$0xf] %v383
        %416 = vst [vmem:[%s137 + $0x30] sm:$0xf] %v384
        %417 = vst [vmem:[%s137 + $0x34] sm:$0xf] %v385
        %418 = vst [vmem:[%s137 + $0x38] sm:$0xf] %v386
        %419 = vst [vmem:[%s137 + $0x3c] sm:$0xf] %v387
        %s420 = sand.u32 %s71, 1
        %s421 = scalar_lea.sflag [#allocation3], %s420
        %s422 = sand.u32 %s71, 1
        %s423 = smul.addr %s422, 64
        %s424 = scalar_lea.vmem [#allocation2], %s423
        // Predicated region
        $region29: #{tpu_custom_call.1} parent=27 // pred_check
          %p425 = pneg %p81
        $region30: #{tpu_custom_call.1} parent=27 // pred_check_branch
          %427 = sbr.rel (%p425) target = $region32
        $region31: #{tpu_custom_call.1} parent=27 // pred_region
          %s428 = smul.u32 16, %s16
          %s430 = ssub.s32 1024, 1024
          %431 = vsyncadd %s421, %s430
          %s432 = smul.addr %s428, 64
          %s433 = scalar_lea.hbm %s2, %s432
          %s434 = sshll.u32 %s424, 4
          %s435 = int_to_ptr.vmem [resolvable:$true] %s434
          %440 = dma.vmem_to_hbm [thread:$0]  %s435, 1024, %s433, %s421, 64, 64, 4
        $region32: #{tpu_custom_call.1} parent=27 // pred_fallthru
          _
      $region28: #{tpu_custom_call.1} parent=5 // pred_fallthru
        _
      %p441 = scmp.le.s32.totalorder 2, %s11
      // Predicated region
      $region33: #{tpu_custom_call.1} parent=5 // pred_check
        %p442 = pneg %p441
      $region34: #{tpu_custom_call.1} parent=5 // pred_check_branch
        %444 = sbr.rel (%p442) target = $region36
      $region35: #{tpu_custom_call.1} parent=5 // pred_region
        %s445 = ssub.s32 %s11, 2
        // Predicated region
        $region37: #{tpu_custom_call.1} parent=35 // pred_check
          %p446 = pneg %p87
        $region38: #{tpu_custom_call.1} parent=35 // pred_check_branch
          %448 = sbr.rel (%p446) target = $region40
        $region39: #{tpu_custom_call.1} parent=35 // pred_region
          %s449 = sand.u32 %s72, 1
          %s450 = scalar_lea.sflag [#allocation3], %s449
          %s451 = sand.u32 %s72, 1
          %s452 = smul.addr %s451, 64
          %s453 = scalar_lea.vmem [#allocation2], %s452
          %454 = dma.done %s450, 1024
        $region40: #{tpu_custom_call.1} parent=35 // pred_fallthru
          _
      $region36: #{tpu_custom_call.1} parent=5 // pred_fallthru
        _
    $region6: #{tpu_custom_call.1} parent=1 // loop_footer
      %s15 = sadd.s32 1, %s11
    $region7: #{tpu_custom_call.1} parent=1 // loop_footer_branch
      %10 = sbr.rel target = $region3
    $region8: #{tpu_custom_call.1} parent=1 // loop_exit
      _
    %455 = vsyncpa [#allocation3], 1
    %s456 = scalar_lea.sflag [#allocation3], 1
    %457 = vsyncpa %s456, 1

</llo_original>
